<compile_context>
chip_gen: v5e
topology: v5e:2x2
jax: 0.10.0
libtpu: 0.0.40
codegen_flags: <defaults>
</compile_context>

<pallas_src>
import functools

import jax
import jax.numpy as jnp
from jax import lax
from jax.experimental import pallas as pl
from jax.experimental.pallas import tpu as pltpu


_LANE = 128
_SINGLE_BUFFER_THRESHOLD = 8 << 20     # double-buffer cost above which weights go single-buffer
_STATIC_UNROLL_MAX_LAYERS = 6


def _device_kind():
    try:
        return jax.devices()[0].device_kind.lower()
    except Exception:
        return ""


def _has_multiple_tensorcores(kind):
    # v4 / v5p (megacore) and v7x have 2 TensorCores a "parallel" grid axis can
    # be sharded over; v5e / v6e have one -> the grid is a serial loop.
    return any(tag in kind for tag in ("v7", "v4", "v5p"))


def _target_rows(kind):
    if "v6" in kind:
        return 2048        # 128 MiB VMEM, 256-wide MXU: go big per step
    if "v7" in kind:
        return 1024        # 64 MiB VMEM per TensorCore
    return 512             # v5e / unknown


def _choose_clouds_per_block(batch, n_points, hidden, itemsize, multi_tc,
                             target_rows, x_block_budget=16 << 20):
    """Whole clouds per grid step (cb must divide the batch)."""
    divisors = [d for d in range(batch, 0, -1) if batch % d == 0]

    def fits(c):
        return (c * n_points <= target_rows
                and 2 * c * n_points * hidden * itemsize <= x_block_budget)

    cands = [c for c in divisors if fits(c)] or [1]
    cpb = cands[0]                      # max block: best for single-TC chips
    if multi_tc and batch >= 2:
        # Multi-TC: prefer an even number of grid steps so both cores get
        # balanced work, keeping per-step M >= 256 when possible.
        even = [c for c in cands if (batch // c) % 2 == 0]
        filled = [c for c in even if c * n_points >= 256]
        if filled:
            cpb = filled[0]
        elif even:
            cpb = even[0]
    return cpb


def _point_stack_kernel(x_ref, w_ref, b_ref, wout_ref, logits_ref, *,
                        num_layers, clouds_per_block, n_points):
    cb, n = clouds_per_block, n_points
    hp = x_ref.shape[-1]
    cdt = w_ref.dtype                       # compute dtype (pre-cast in wrapper)

    # Flatten all clouds of this block into one big M so every layer is a
    # single (cb*n, H) x (H, H) MXU matmul (f32 accumulation).
    h = x_ref[...].reshape(cb * n, hp)

    def apply_layer(h_in, w, b):
        z = jnp.dot(h_in, w, preferred_element_type=jnp.float32) + b   # f32
        return jnp.maximum(z, 0.0).astype(cdt)

    if num_layers <= _STATIC_UNROLL_MAX_LAYERS:
        for layer in range(num_layers):      # static unroll (LLO visibility)
            h = apply_layer(h, w_ref[layer], b_ref[layer])
    else:
        # bound vreg live ranges for deep stacks; loop cost is negligible vs
        # the per-layer matmul
        h = lax.fori_loop(0, num_layers,
                          lambda l, hh: apply_layer(hh, w_ref[l], b_ref[l]), h)

    # GAP commutes with the linear head: one fused sublane mean per block, then
    # a VPU multiply + lane reduce (no (M, H) @ (H, 1) lane-1 matmul).
    h_mean = jnp.mean(h.reshape(cb, n, hp).astype(jnp.float32), axis=1)  # (cb, hp)
    logits = jnp.sum(h_mean * wout_ref[...], axis=-1, keepdims=True)     # (cb, 1)
    logits_ref[...] = logits.reshape(1, cb, 1)


def point_forward_and_loss(x, w_stack, b_stack, w_out, b_out, y_true,
                           compute_dtype=jnp.float32):
    """x: [B, N, H] -> (logits [B], scalar BCEWithLogits loss).

    compute_dtype=jnp.bfloat16 halves x/W traffic and uses the bf16 MXU path on
    v6e/v7x (accumulation stays f32); the f32 default matches the PyTorch
    module's numerics (the 1e-4 self-test only holds in f32 mode).
    """
    B, N, H = x.shape
    L = w_stack.shape[0]

    # Lane-dense padding: zero-pad the hidden dim to 128 lanes when small.
    # Zero weight rows/cols + ReLU(0)=0 make the result exact.
    Hp = _LANE if H < _LANE else H
    if Hp != H:
        p = Hp - H
        x = jnp.pad(x, ((0, 0), (0, 0), (0, p)))
        w_stack = jnp.pad(w_stack, ((0, 0), (0, p), (0, p)))
        b_stack = jnp.pad(b_stack, ((0, 0), (0, 0), (0, p)))
        w_out = jnp.pad(w_out, ((0, p), (0, 0)))

    # Pre-cast matmul operands once in the wrapper (not per grid step, per layer
    # inside the kernel). Bias / ReLU / head stay f32 (v5e VPU has no bf16).
    x_c = x.astype(compute_dtype)
    w_c = w_stack.astype(compute_dtype)
    b_f = b_stack.astype(jnp.float32)
    wout_row = w_out.reshape(1, Hp).astype(jnp.float32)

    kind = _device_kind()
    multi_tc = _has_multiple_tensorcores(kind)
    itm = jnp.dtype(compute_dtype).itemsize
    cb = _choose_clouds_per_block(B, N, Hp, itm, multi_tc, _target_rows(kind))
    g = B // cb

    # VMEM budgeting: single-buffer the grid-invariant weight/bias stacks when
    # double-buffering them would be expensive (e.g. L=12, H=512 on v7x's
    # 64 MiB VMEM / 32 MiB scoped default).
    w_bytes = L * Hp * Hp * itm
    b_bytes = L * Hp * 4
    single_buffer_weights = 2 * (w_bytes + b_bytes) > _SINGLE_BUFFER_THRESHOLD
    w_buf = 1 if single_buffer_weights else 2
    x_block_bytes = cb * N * Hp * itm
    footprint = (2 * x_block_bytes                      # x double buffer
                 + w_buf * (w_bytes + b_bytes)          # weight + bias stacks
                 + 2 * Hp * 4                           # head row
                 + 4 * cb * N * Hp * 4)                 # activation headroom
    vmem_limit = int(min(128 << 20, max(32 << 20, footprint * 3 // 2 + (4 << 20))))

    if single_buffer_weights:
        w_spec = pl.BlockSpec((L, Hp, Hp), lambda i: (0, 0, 0),
                              pipeline_mode=pl.Buffered(1))
        b_spec = pl.BlockSpec((L, 1, Hp), lambda i: (0, 0, 0),
                              pipeline_mode=pl.Buffered(1))
    else:
        w_spec = pl.BlockSpec((L, Hp, Hp), lambda i: (0, 0, 0))
        b_spec = pl.BlockSpec((L, 1, Hp), lambda i: (0, 0, 0))

    kernel = functools.partial(_point_stack_kernel, num_layers=L,
                               clouds_per_block=cb, n_points=N)

    cost = pl.CostEstimate(
        flops=2 * B * N * Hp * Hp * L + 2 * B * N * Hp,
        transcendentals=0,
        bytes_accessed=(B * N * Hp * itm + L * Hp * Hp * itm + L * Hp * 4
                        + Hp * 4 + B * 4))

    logits = pl.pallas_call(
        kernel,
        out_shape=jax.ShapeDtypeStruct((g, cb, 1), jnp.float32),
        grid_spec=pltpu.PrefetchScalarGridSpec(
            num_scalar_prefetch=0,
            grid=(g,),
            in_specs=[
                pl.BlockSpec((cb, N, Hp), lambda i: (i, 0, 0)),   # cb whole clouds
                w_spec,                                           # all layer W (grid-invariant)
                b_spec,                                           # all layer b (grid-invariant)
                pl.BlockSpec((1, Hp), lambda i: (0, 0)),          # head W as a row
            ],
            out_specs=pl.BlockSpec((1, cb, 1), lambda i: (i, 0, 0)),
        ),
        compiler_params=pltpu.CompilerParams(
            dimension_semantics=("parallel",),
            vmem_limit_bytes=vmem_limit),
        cost_estimate=cost,
    )(x_c, w_c, b_f, wout_row)

    logits = logits.reshape(B) + b_out.reshape(()).astype(jnp.float32)

    # BCEWithLogits (numerically stable form) on B per-cloud logits: tiny, so
    # plain jnp — no extra padded pallas_call or per-step label/loss DMA streams.
    y = y_true.astype(jnp.float32).reshape(B)
    loss = jnp.mean(jnp.maximum(logits, 0.0) - logits * y
                    + jnp.log1p(jnp.exp(-jnp.abs(logits))))
    return logits, loss


# ----------------------------------------------------------------------------
# Pure-JAX references (correctness check)
# ----------------------------------------------------------------------------
def ref_forward(x, w_stack, b_stack, w_out, b_out):
    h = x
    for l in range(w_stack.shape[0]):
        h = jax.nn.relu(h @ w_stack[l] + b_stack[l])
    per_point = h @ w_out + b_out[0, 0]          # (B, N, 1)
    return jnp.mean(per_point, axis=(1, 2))


def ref_bce(y_pred, y_true):
    z, y = y_pred, y_true
    return jnp.mean(jnp.maximum(z, 0.0) - z * y + jnp.log1p(jnp.exp(-jnp.abs(z))))


if __name__ == "__main__":
    # small shapes consistent with a point-cloud classifier
    B, N, H = 2, 128, 32        # 2 clouds, 128 points each, 32 hidden features
    L = 4                        # model_kwargs['num_layers'] = 4 (default is 12)

    key = jax.random.PRNGKey(0)
    k_x, k_w, k_b, k_wo, k_y = jax.random.split(key, 5)

    x = jax.random.normal(k_x, (B, N, H), jnp.float32)
    w_stack = jax.random.normal(k_w, (L, H, H), jnp.float32) * (2.0 / H) ** 0.5
    b_stack = jax.random.normal(k_b, (L, 1, H), jnp.float32) * 0.01
    w_out = jax.random.normal(k_wo, (H, 1), jnp.float32) * (1.0 / H) ** 0.5
    b_out = jnp.full((1, 1), 0.1, jnp.float32)
    y_true = (jax.random.uniform(k_y, (B,)) > 0.5).astype(jnp.float32)

    fwd = jax.jit(point_forward_and_loss)
    logits, loss = jax.block_until_ready(
        fwd(x, w_stack, b_stack, w_out, b_out, y_true))

    # verify against pure-JAX reference
    logits_ref = ref_forward(x, w_stack, b_stack, w_out, b_out)
    loss_ref = ref_bce(logits_ref, y_true)
    assert jnp.allclose(logits, logits_ref, atol=1e-4, rtol=1e-4), (logits, logits_ref)
    assert jnp.allclose(loss, loss_ref, atol=1e-4, rtol=1e-4), (loss, loss_ref)

    print("KERNEL_OK")
</pallas_src>

<mosaic_0001>
module attributes {stable_mosaic.version = 11 : i64} {
  func.func @_point_stack_kernel(%arg0: i32, %arg1: memref<2x128x128xf32, #tpu.memory_space<vmem>>, %arg2: memref<4x128x128xf32, #tpu.memory_space<vmem>>, %arg3: memref<4x1x128xf32, #tpu.memory_space<vmem>>, %arg4: memref<1x128xf32, #tpu.memory_space<vmem>>, %arg5: memref<1x2x1xf32, #tpu.memory_space<vmem>>) attributes {dimension_semantics = [#tpu.dimension_semantics<parallel>], iteration_bounds = array<i64: 1>, scalar_prefetch = 0 : i64, scratch_operands = 0 : i64, tpu.core_type = #tpu.core_type<tc>, window_params = [{transform_indices = @transform_0, window_bounds = array<i64: 2, 128, 128>}, {pipeline_mode = #tpu.pipeline_mode<synchronous>, transform_indices = @transform_1, window_bounds = array<i64: 4, 128, 128>}, {pipeline_mode = #tpu.pipeline_mode<synchronous>, transform_indices = @transform_2, window_bounds = array<i64: 4, 1, 128>}, {pipeline_mode = #tpu.pipeline_mode<synchronous>, transform_indices = @transform_3, window_bounds = array<i64: 1, 128>}, {transform_indices = @transform_4, window_bounds = array<i64: 1, 2, 1>}]} {
    %c0 = arith.constant 0 : index
    %c0_0 = arith.constant 0 : index
    %c0_1 = arith.constant 0 : index
    %0 = vector.load %arg1[%c0, %c0_0, %c0_1] : memref<2x128x128xf32, #tpu.memory_space<vmem>>, vector<2x128x128xf32>
    %1 = vector.shape_cast %0 : vector<2x128x128xf32> to vector<256x128xf32>
    %c0_2 = arith.constant 0 : index
    %c0_3 = arith.constant 0 : index
    %c0_4 = arith.constant 0 : index
    %2 = vector.load %arg2[%c0_2, %c0_3, %c0_4] : memref<4x128x128xf32, #tpu.memory_space<vmem>>, vector<1x128x128xf32>
    %3 = vector.shape_cast %2 : vector<1x128x128xf32> to vector<128x128xf32>
    %c0_5 = arith.constant 0 : index
    %c0_6 = arith.constant 0 : index
    %c0_7 = arith.constant 0 : index
    %4 = vector.load %arg3[%c0_5, %c0_6, %c0_7] : memref<4x1x128xf32, #tpu.memory_space<vmem>>, vector<1x1x128xf32>
    %5 = vector.shape_cast %4 : vector<1x1x128xf32> to vector<1x128xf32>
    %cst = arith.constant dense<0.000000e+00> : vector<256x128xf32>
    %6 = tpu.matmul %1, %3, %cst {dimension_numbers = #tpu.dot_dimension_numbers<[1], [0], [0], [1], [0, 0, 1, 1], [], []>} : vector<256x128xf32>, vector<128x128xf32>, vector<256x128xf32> -> vector<256x128xf32>
    %7 = vector.broadcast %5 : vector<1x128xf32> to vector<256x128xf32>
    %8 = arith.addf %6, %7 : vector<256x128xf32>
    %cst_8 = arith.constant 0.000000e+00 : f32
    %9 = vector.broadcast %cst_8 : f32 to vector<256x128xf32>
    %10 = arith.maximumf %8, %9 : vector<256x128xf32>
    %c1 = arith.constant 1 : index
    %c0_9 = arith.constant 0 : index
    %c0_10 = arith.constant 0 : index
    %11 = vector.load %arg2[%c1, %c0_9, %c0_10] : memref<4x128x128xf32, #tpu.memory_space<vmem>>, vector<1x128x128xf32>
    %12 = vector.shape_cast %11 : vector<1x128x128xf32> to vector<128x128xf32>
    %c1_11 = arith.constant 1 : index
    %c0_12 = arith.constant 0 : index
    %c0_13 = arith.constant 0 : index
    %13 = vector.load %arg3[%c1_11, %c0_12, %c0_13] : memref<4x1x128xf32, #tpu.memory_space<vmem>>, vector<1x1x128xf32>
    %14 = vector.shape_cast %13 : vector<1x1x128xf32> to vector<1x128xf32>
    %cst_14 = arith.constant dense<0.000000e+00> : vector<256x128xf32>
    %15 = tpu.matmul %10, %12, %cst_14 {dimension_numbers = #tpu.dot_dimension_numbers<[1], [0], [0], [1], [0, 0, 1, 1], [], []>} : vector<256x128xf32>, vector<128x128xf32>, vector<256x128xf32> -> vector<256x128xf32>
    %16 = vector.broadcast %14 : vector<1x128xf32> to vector<256x128xf32>
    %17 = arith.addf %15, %16 : vector<256x128xf32>
    %cst_15 = arith.constant 0.000000e+00 : f32
    %18 = vector.broadcast %cst_15 : f32 to vector<256x128xf32>
    %19 = arith.maximumf %17, %18 : vector<256x128xf32>
    %c2 = arith.constant 2 : index
    %c0_16 = arith.constant 0 : index
    %c0_17 = arith.constant 0 : index
    %20 = vector.load %arg2[%c2, %c0_16, %c0_17] : memref<4x128x128xf32, #tpu.memory_space<vmem>>, vector<1x128x128xf32>
    %21 = vector.shape_cast %20 : vector<1x128x128xf32> to vector<128x128xf32>
    %c2_18 = arith.constant 2 : index
    %c0_19 = arith.constant 0 : index
    %c0_20 = arith.constant 0 : index
    %22 = vector.load %arg3[%c2_18, %c0_19, %c0_20] : memref<4x1x128xf32, #tpu.memory_space<vmem>>, vector<1x1x128xf32>
    %23 = vector.shape_cast %22 : vector<1x1x128xf32> to vector<1x128xf32>
    %cst_21 = arith.constant dense<0.000000e+00> : vector<256x128xf32>
    %24 = tpu.matmul %19, %21, %cst_21 {dimension_numbers = #tpu.dot_dimension_numbers<[1], [0], [0], [1], [0, 0, 1, 1], [], []>} : vector<256x128xf32>, vector<128x128xf32>, vector<256x128xf32> -> vector<256x128xf32>
    %25 = vector.broadcast %23 : vector<1x128xf32> to vector<256x128xf32>
    %26 = arith.addf %24, %25 : vector<256x128xf32>
    %cst_22 = arith.constant 0.000000e+00 : f32
    %27 = vector.broadcast %cst_22 : f32 to vector<256x128xf32>
    %28 = arith.maximumf %26, %27 : vector<256x128xf32>
    %c3 = arith.constant 3 : index
    %c0_23 = arith.constant 0 : index
    %c0_24 = arith.constant 0 : index
    %29 = vector.load %arg2[%c3, %c0_23, %c0_24] : memref<4x128x128xf32, #tpu.memory_space<vmem>>, vector<1x128x128xf32>
    %30 = vector.shape_cast %29 : vector<1x128x128xf32> to vector<128x128xf32>
    %c3_25 = arith.constant 3 : index
    %c0_26 = arith.constant 0 : index
    %c0_27 = arith.constant 0 : index
    %31 = vector.load %arg3[%c3_25, %c0_26, %c0_27] : memref<4x1x128xf32, #tpu.memory_space<vmem>>, vector<1x1x128xf32>
    %32 = vector.shape_cast %31 : vector<1x1x128xf32> to vector<1x128xf32>
    %cst_28 = arith.constant dense<0.000000e+00> : vector<256x128xf32>
    %33 = tpu.matmul %28, %30, %cst_28 {dimension_numbers = #tpu.dot_dimension_numbers<[1], [0], [0], [1], [0, 0, 1, 1], [], []>} : vector<256x128xf32>, vector<128x128xf32>, vector<256x128xf32> -> vector<256x128xf32>
    %34 = vector.broadcast %32 : vector<1x128xf32> to vector<256x128xf32>
    %35 = arith.addf %33, %34 : vector<256x128xf32>
    %cst_29 = arith.constant 0.000000e+00 : f32
    %36 = vector.broadcast %cst_29 : f32 to vector<256x128xf32>
    %37 = arith.maximumf %35, %36 : vector<256x128xf32>
    %38 = vector.shape_cast %37 : vector<256x128xf32> to vector<2x128x128xf32>
    %cst_30 = arith.constant dense<0.000000e+00> : vector<2x128xf32>
    %39 = vector.multi_reduction <add>, %38, %cst_30 [1] : vector<2x128x128xf32> to vector<2x128xf32>
    %cst_31 = arith.constant 1.280000e+02 : f32
    %40 = vector.broadcast %cst_31 : f32 to vector<2x128xf32>
    %41 = arith.divf %39, %40 : vector<2x128xf32>
    %c0_32 = arith.constant 0 : index
    %c0_33 = arith.constant 0 : index
    %42 = vector.load %arg4[%c0_32, %c0_33] : memref<1x128xf32, #tpu.memory_space<vmem>>, vector<1x128xf32>
    %43 = vector.broadcast %42 : vector<1x128xf32> to vector<2x128xf32>
    %44 = arith.mulf %41, %43 : vector<2x128xf32>
    %cst_34 = arith.constant dense<0.000000e+00> : vector<2xf32>
    %45 = vector.multi_reduction <add>, %44, %cst_34 [1] : vector<2x128xf32> to vector<2xf32>
    %46 = vector.shape_cast %45 : vector<2xf32> to vector<2x1xf32>
    %47 = vector.shape_cast %46 : vector<2x1xf32> to vector<1x2x1xf32>
    %c0_35 = arith.constant 0 : index
    %c0_36 = arith.constant 0 : index
    %c0_37 = arith.constant 0 : index
    %48 = vector.load %arg5[%c0_35, %c0_36, %c0_37] : memref<1x2x1xf32, #tpu.memory_space<vmem>>, vector<1x2x1xf32>
    tpu.vector_store %arg5[%c0_35, %c0_36, %c0_37], %47 {strides = array<i32>} : memref<1x2x1xf32, #tpu.memory_space<vmem>>, vector<1x2x1xf32>,
    return
  }
  func.func @transform_0(%arg0: i32) -> (i32, i32, i32) {
    %c0_i32 = arith.constant 0 : i32
    %c0_i32_0 = arith.constant 0 : i32
    %c0_i32_1 = arith.constant 0 : i32
    return %arg0, %c0_i32, %c0_i32_0 : i32, i32, i32
  }
  func.func @transform_1(%arg0: i32) -> (i32, i32, i32) {
    %c0_i32 = arith.constant 0 : i32
    %c0_i32_0 = arith.constant 0 : i32
    %c0_i32_1 = arith.constant 0 : i32
    %c0_i32_2 = arith.constant 0 : i32
    return %c0_i32, %c0_i32_0, %c0_i32_1 : i32, i32, i32
  }
  func.func @transform_2(%arg0: i32) -> (i32, i32, i32) {
    %c0_i32 = arith.constant 0 : i32
    %c0_i32_0 = arith.constant 0 : i32
    %c0_i32_1 = arith.constant 0 : i32
    %c0_i32_2 = arith.constant 0 : i32
    return %c0_i32, %c0_i32_0, %c0_i32_1 : i32, i32, i32
  }
  func.func @transform_3(%arg0: i32) -> (i32, i32) {
    %c0_i32 = arith.constant 0 : i32
    %c0_i32_0 = arith.constant 0 : i32
    %c0_i32_1 = arith.constant 0 : i32
    return %c0_i32, %c0_i32_0 : i32, i32
  }
  func.func @transform_4(%arg0: i32) -> (i32, i32, i32) {
    %c0_i32 = arith.constant 0 : i32
    %c0_i32_0 = arith.constant 0 : i32
    %c0_i32_1 = arith.constant 0 : i32
    return %arg0, %c0_i32, %c0_i32_0 : i32, i32, i32
  }
}

</mosaic_0001>

<llo_original>
// kernel: point_forward_and_loss.1
$region0: #{point_forward_and_loss.1}
  #allocation0 [shape = 'u32[]', space=smem, size = 0x4, offset = 0x4, fixed_abs, tag = 'smem constant byte address 0x4 - core index']
  #allocation1 [shape = 'u32[72,128]{1,0:T(1,128)}', space=vmem, size = 0x9000, scoped, tag = 'internal scratch']
  %s0 = inlined_call_operand.vmem [shape: f32[2,128,128], index: 0, kind: input, shape index: {}]
  %s1 = inlined_call_operand.vmem [shape: f32[4,128,128], index: 1, kind: input, shape index: {}]
  %s2 = inlined_call_operand.vmem [shape: f32[4,1,128], index: 2, kind: input, shape index: {}]
  %s3 = inlined_call_operand.vmem [shape: f32[1,128], index: 3, kind: input, shape index: {}]
  %s4 = inlined_call_operand.vmem [shape: f32[1,2,1], index: 4, kind: output, shape index: {}]
  %s5 = sld [smem:[#allocation0]]
  $region26: #{point_forward_and_loss.1} parent=0
    _
  %s7 = ssub.s32 1, %s5
  %s8 = scalar_select 0, %s7, %s5
  // Predicated region
  $region2: #{point_forward_and_loss.1} parent=0 // pred_check
    _
  $region3: #{point_forward_and_loss.1} parent=0 // pred_check_branch
    %10 = sbr.rel (0) target = $region5
  $region4: #{point_forward_and_loss.1} parent=0 // pred_region
    _
  $region5: #{point_forward_and_loss.1} parent=0 // pred_fallthru
    _
  // Predicated region
  $region6: #{point_forward_and_loss.1} parent=0 // pred_check
    _
  $region7: #{point_forward_and_loss.1} parent=0 // pred_check_branch
    %12 = sbr.rel (0) target = $region9
  $region8: #{point_forward_and_loss.1} parent=0 // pred_region
    _
  $region9: #{point_forward_and_loss.1} parent=0 // pred_fallthru
    _
  // Predicated region
  $region10: #{point_forward_and_loss.1} parent=0 // pred_check
    _
  $region11: #{point_forward_and_loss.1} parent=0 // pred_check_branch
    %14 = sbr.rel (0) target = $region13
  $region12: #{point_forward_and_loss.1} parent=0 // pred_region
    _
  $region13: #{point_forward_and_loss.1} parent=0 // pred_fallthru
    _
  // Predicated region
  $region14: #{point_forward_and_loss.1} parent=0 // pred_check
    _
  $region15: #{point_forward_and_loss.1} parent=0 // pred_check_branch
    %16 = sbr.rel (0) target = $region17
  $region16: #{point_forward_and_loss.1} parent=0 // pred_region
    _
  $region17: #{point_forward_and_loss.1} parent=0 // pred_fallthru
    _
  %v17 = vld [vmem:[%s0] sm:$0xff]
  %v18 = vld [vmem:[%s0 + $0x8] sm:$0xff]
  %v19 = vld [vmem:[%s0 + $0x10] sm:$0xff]
  %v20 = vld [vmem:[%s0 + $0x18] sm:$0xff]
  %v21 = vld [vmem:[%s0 + $0x20] sm:$0xff]
  %v22 = vld [vmem:[%s0 + $0x28] sm:$0xff]
  %v23 = vld [vmem:[%s0 + $0x30] sm:$0xff]
  %v24 = vld [vmem:[%s0 + $0x38] sm:$0xff]
  %v25 = vld [vmem:[%s0 + $0x40] sm:$0xff]
  %v26 = vld [vmem:[%s0 + $0x48] sm:$0xff]
  %v27 = vld [vmem:[%s0 + $0x50] sm:$0xff]
  %v28 = vld [vmem:[%s0 + $0x58] sm:$0xff]
  %v29 = vld [vmem:[%s0 + $0x60] sm:$0xff]
  %v30 = vld [vmem:[%s0 + $0x68] sm:$0xff]
  %v31 = vld [vmem:[%s0 + $0x70] sm:$0xff]
  %v32 = vld [vmem:[%s0 + $0x78] sm:$0xff]
  %v33 = vld [vmem:[%s0 + $0x80] sm:$0xff]
  %v34 = vld [vmem:[%s0 + $0x88] sm:$0xff]
  %v35 = vld [vmem:[%s0 + $0x90] sm:$0xff]
  %v36 = vld [vmem:[%s0 + $0x98] sm:$0xff]
  %v37 = vld [vmem:[%s0 + $0xa0] sm:$0xff]
  %v38 = vld [vmem:[%s0 + $0xa8] sm:$0xff]
  %v39 = vld [vmem:[%s0 + $0xb0] sm:$0xff]
  %v40 = vld [vmem:[%s0 + $0xb8] sm:$0xff]
  %v41 = vld [vmem:[%s0 + $0xc0] sm:$0xff]
  %v42 = vld [vmem:[%s0 + $0xc8] sm:$0xff]
  %v43 = vld [vmem:[%s0 + $0xd0] sm:$0xff]
  %v44 = vld [vmem:[%s0 + $0xd8] sm:$0xff]
  %v45 = vld [vmem:[%s0 + $0xe0] sm:$0xff]
  %v46 = vld [vmem:[%s0 + $0xe8] sm:$0xff]
  %v47 = vld [vmem:[%s0 + $0xf0] sm:$0xff]
  %v48 = vld [vmem:[%s0 + $0xf8] sm:$0xff]
  %v49 = vld [vmem:[%s1] sm:$0xff]
  %v50 = vld [vmem:[%s1 + $0x8] sm:$0xff]
  %v51 = vld [vmem:[%s1 + $0x10] sm:$0xff]
  %v52 = vld [vmem:[%s1 + $0x18] sm:$0xff]
  %v53 = vld [vmem:[%s1 + $0x20] sm:$0xff]
  %v54 = vld [vmem:[%s1 + $0x28] sm:$0xff]
  %v55 = vld [vmem:[%s1 + $0x30] sm:$0xff]
  %v56 = vld [vmem:[%s1 + $0x38] sm:$0xff]
  %v57 = vld [vmem:[%s1 + $0x40] sm:$0xff]
  %v58 = vld [vmem:[%s1 + $0x48] sm:$0xff]
  %v59 = vld [vmem:[%s1 + $0x50] sm:$0xff]
  %v60 = vld [vmem:[%s1 + $0x58] sm:$0xff]
  %v61 = vld [vmem:[%s1 + $0x60] sm:$0xff]
  %v62 = vld [vmem:[%s1 + $0x68] sm:$0xff]
  %v63 = vld [vmem:[%s1 + $0x70] sm:$0xff]
  %v64 = vld [vmem:[%s1 + $0x78] sm:$0xff]
  %v65 = vld [vmem:[%s2] sm:$0x1]
  %v67 = vperm.slane %v65, 0
  %69 = vmatpush.msra.mxu0 %v64
  %70 = vmatpush.msra.mxu0 %v63
  %71 = vmatpush.msra.mxu0 %v62
  %72 = vmatpush.msra.mxu0 %v61
  %73 = vmatpush.msra.mxu0 %v60
  %74 = vmatpush.msra.mxu0 %v59
  %75 = vmatpush.msra.mxu0 %v58
  %76 = vmatpush.msra.mxu0 %v57
  %77 = vmatpush.msra.mxu0 %v56
  %78 = vmatpush.msra.mxu0 %v55
  %79 = vmatpush.msra.mxu0 %v54
  %80 = vmatpush.msra.mxu0 %v53
  %81 = vmatpush.msra.mxu0 %v52
  %82 = vmatpush.msra.mxu0 %v51
  %83 = vmatpush.msra.mxu0 %v50
  %84 = vmatpush.msra.mxu0 %v49
  %85 = vmatmul.f32.gmra.mxu0 %v17
  %v86 = vpop.f32.mrf.mxu0
  %v87 = vadd.f32 %v67, %v86
  %88 = vmatmul.f32.gmra.mxu0 %v18
  %v89 = vpop.f32.mrf.mxu0
  %v90 = vadd.f32 %v67, %v89
  %91 = vmatmul.f32.gmra.mxu0 %v19
  %v92 = vpop.f32.mrf.mxu0
  %v93 = vadd.f32 %v67, %v92
  %94 = vmatmul.f32.gmra.mxu0 %v20
  %v95 = vpop.f32.mrf.mxu0
  %v96 = vadd.f32 %v67, %v95
  %97 = vmatmul.f32.gmra.mxu0 %v21
  %v98 = vpop.f32.mrf.mxu0
  %v99 = vadd.f32 %v67, %v98
  %100 = vmatmul.f32.gmra.mxu0 %v22
  %v101 = vpop.f32.mrf.mxu0
  %v102 = vadd.f32 %v67, %v101
  %103 = vmatmul.f32.gmra.mxu0 %v23
  %v104 = vpop.f32.mrf.mxu0
  %v105 = vadd.f32 %v67, %v104
  %106 = vmatmul.f32.gmra.mxu0 %v24
  %v107 = vpop.f32.mrf.mxu0
  %v108 = vadd.f32 %v67, %v107
  %109 = vmatmul.f32.gmra.mxu0 %v25
  %v110 = vpop.f32.mrf.mxu0
  %v111 = vadd.f32 %v67, %v110
  %112 = vmatmul.f32.gmra.mxu0 %v26
  %v113 = vpop.f32.mrf.mxu0
  %v114 = vadd.f32 %v67, %v113
  %115 = vmatmul.f32.gmra.mxu0 %v27
  %v116 = vpop.f32.mrf.mxu0
  %v117 = vadd.f32 %v67, %v116
  %118 = vmatmul.f32.gmra.mxu0 %v28
  %v119 = vpop.f32.mrf.mxu0
  %v120 = vadd.f32 %v67, %v119
  %121 = vmatmul.f32.gmra.mxu0 %v29
  %v122 = vpop.f32.mrf.mxu0
  %v123 = vadd.f32 %v67, %v122
  %124 = vmatmul.f32.gmra.mxu0 %v30
  %v125 = vpop.f32.mrf.mxu0
  %v126 = vadd.f32 %v67, %v125
  %127 = vmatmul.f32.gmra.mxu0 %v31
  %v128 = vpop.f32.mrf.mxu0
  %v129 = vadd.f32 %v67, %v128
  %130 = vmatmul.f32.gmra.mxu0 %v32
  %v131 = vpop.f32.mrf.mxu0
  %v132 = vadd.f32 %v67, %v131
  %133 = vmatmul.f32.gmra.mxu0 %v33
  %v134 = vpop.f32.mrf.mxu0
  %v135 = vadd.f32 %v67, %v134
  %136 = vmatmul.f32.gmra.mxu0 %v34
  %v137 = vpop.f32.mrf.mxu0
  %v138 = vadd.f32 %v67, %v137
  %139 = vmatmul.f32.gmra.mxu0 %v35
  %v140 = vpop.f32.mrf.mxu0
  %v141 = vadd.f32 %v67, %v140
  %142 = vmatmul.f32.gmra.mxu0 %v36
  %v143 = vpop.f32.mrf.mxu0
  %v144 = vadd.f32 %v67, %v143
  %145 = vmatmul.f32.gmra.mxu0 %v37
  %v146 = vpop.f32.mrf.mxu0
  %v147 = vadd.f32 %v67, %v146
  %148 = vmatmul.f32.gmra.mxu0 %v38
  %v149 = vpop.f32.mrf.mxu0
  %v150 = vadd.f32 %v67, %v149
  %151 = vmatmul.f32.gmra.mxu0 %v39
  %v152 = vpop.f32.mrf.mxu0
  %v153 = vadd.f32 %v67, %v152
  %154 = vmatmul.f32.gmra.mxu0 %v40
  %v155 = vpop.f32.mrf.mxu0
  %v156 = vadd.f32 %v67, %v155
  %157 = vmatmul.f32.gmra.mxu0 %v41
  %v158 = vpop.f32.mrf.mxu0
  %v159 = vadd.f32 %v67, %v158
  %160 = vmatmul.f32.gmra.mxu0 %v42
  %v161 = vpop.f32.mrf.mxu0
  %v162 = vadd.f32 %v67, %v161
  %163 = vmatmul.f32.gmra.mxu0 %v43
  %v164 = vpop.f32.mrf.mxu0
  %v165 = vadd.f32 %v67, %v164
  %166 = vmatmul.f32.gmra.mxu0 %v44
  %v167 = vpop.f32.mrf.mxu0
  %v168 = vadd.f32 %v67, %v167
  %169 = vmatmul.f32.gmra.mxu0 %v45
  %v170 = vpop.f32.mrf.mxu0
  %v171 = vadd.f32 %v67, %v170
  %172 = vmatmul.f32.gmra.mxu0 %v46
  %v173 = vpop.f32.mrf.mxu0
  %v174 = vadd.f32 %v67, %v173
  %175 = vmatmul.f32.gmra.mxu0 %v47
  %v176 = vpop.f32.mrf.mxu0
  %v177 = vadd.f32 %v67, %v176
  %178 = vmatmul.f32.gmra.mxu0 %v48
  %v179 = vpop.f32.mrf.mxu0
  %v180 = vadd.f32 %v67, %v179
  %181 = vdwg.mxu0
  %v182 = vmax.f32 %v87, 0.0
  %v183 = vmax.f32 %v90, 0.0
  %v184 = vmax.f32 %v93, 0.0
  %v185 = vmax.f32 %v96, 0.0
  %v186 = vmax.f32 %v99, 0.0
  %v187 = vmax.f32 %v102, 0.0
  %v188 = vmax.f32 %v105, 0.0
  %v189 = vmax.f32 %v108, 0.0
  %v190 = vmax.f32 %v111, 0.0
  %v191 = vmax.f32 %v114, 0.0
  %v192 = vmax.f32 %v117, 0.0
  %v193 = vmax.f32 %v120, 0.0
  %v194 = vmax.f32 %v123, 0.0
  %v195 = vmax.f32 %v126, 0.0
  %v196 = vmax.f32 %v129, 0.0
  %v197 = vmax.f32 %v132, 0.0
  %v198 = vmax.f32 %v135, 0.0
  %v199 = vmax.f32 %v138, 0.0
  %v200 = vmax.f32 %v141, 0.0
  %v201 = vmax.f32 %v144, 0.0
  %v202 = vmax.f32 %v147, 0.0
  %v203 = vmax.f32 %v150, 0.0
  %v204 = vmax.f32 %v153, 0.0
  %v205 = vmax.f32 %v156, 0.0
  %v206 = vmax.f32 %v159, 0.0
  %v207 = vmax.f32 %v162, 0.0
  %v208 = vmax.f32 %v165, 0.0
  %v209 = vmax.f32 %v168, 0.0
  %v210 = vmax.f32 %v171, 0.0
  %v211 = vmax.f32 %v174, 0.0
  %v212 = vmax.f32 %v177, 0.0
  %v213 = vmax.f32 %v180, 0.0
  %s214 = scalar_lea.vmem %s1, 128
  %v215 = vld [vmem:[%s214] sm:$0xff]
  %v216 = vld [vmem:[%s214 + $0x8] sm:$0xff]
  %v217 = vld [vmem:[%s214 + $0x10] sm:$0xff]
  %v218 = vld [vmem:[%s214 + $0x18] sm:$0xff]
  %v219 = vld [vmem:[%s214 + $0x20] sm:$0xff]
  %v220 = vld [vmem:[%s214 + $0x28] sm:$0xff]
  %v221 = vld [vmem:[%s214 + $0x30] sm:$0xff]
  %v222 = vld [vmem:[%s214 + $0x38] sm:$0xff]
  %v223 = vld [vmem:[%s214 + $0x40] sm:$0xff]
  %v224 = vld [vmem:[%s214 + $0x48] sm:$0xff]
  %v225 = vld [vmem:[%s214 + $0x50] sm:$0xff]
  %v226 = vld [vmem:[%s214 + $0x58] sm:$0xff]
  %v227 = vld [vmem:[%s214 + $0x60] sm:$0xff]
  %v228 = vld [vmem:[%s214 + $0x68] sm:$0xff]
  %v229 = vld [vmem:[%s214 + $0x70] sm:$0xff]
  %v230 = vld [vmem:[%s214 + $0x78] sm:$0xff]
  %s231 = scalar_lea.vmem %s2, 1
  %v232 = vld [vmem:[%s231] sm:$0x1]
  %v234 = vperm.slane %v232, 0
  %236 = vmatpush.msra.mxu0 %v230
  %237 = vmatpush.msra.mxu0 %v229
  %238 = vmatpush.msra.mxu0 %v228
  %239 = vmatpush.msra.mxu0 %v227
  %240 = vmatpush.msra.mxu0 %v226
  %241 = vmatpush.msra.mxu0 %v225
  %242 = vmatpush.msra.mxu0 %v224
  %243 = vmatpush.msra.mxu0 %v223
  %244 = vmatpush.msra.mxu0 %v222
  %245 = vmatpush.msra.mxu0 %v221
  %246 = vmatpush.msra.mxu0 %v220
  %247 = vmatpush.msra.mxu0 %v219
  %248 = vmatpush.msra.mxu0 %v218
  %249 = vmatpush.msra.mxu0 %v217
  %250 = vmatpush.msra.mxu0 %v216
  %251 = vmatpush.msra.mxu0 %v215
  %252 = vmatmul.f32.gmra.mxu0 %v182
  %v253 = vpop.f32.mrf.mxu0
  %v254 = vadd.f32 %v234, %v253
  %255 = vmatmul.f32.gmra.mxu0 %v183
  %v256 = vpop.f32.mrf.mxu0
  %v257 = vadd.f32 %v234, %v256
  %258 = vmatmul.f32.gmra.mxu0 %v184
  %v259 = vpop.f32.mrf.mxu0
  %v260 = vadd.f32 %v234, %v259
  %261 = vmatmul.f32.gmra.mxu0 %v185
  %v262 = vpop.f32.mrf.mxu0
  %v263 = vadd.f32 %v234, %v262
  %264 = vmatmul.f32.gmra.mxu0 %v186
  %v265 = vpop.f32.mrf.mxu0
  %v266 = vadd.f32 %v234, %v265
  %267 = vmatmul.f32.gmra.mxu0 %v187
  %v268 = vpop.f32.mrf.mxu0
  %v269 = vadd.f32 %v234, %v268
  %270 = vmatmul.f32.gmra.mxu0 %v188
  %v271 = vpop.f32.mrf.mxu0
  %v272 = vadd.f32 %v234, %v271
  %273 = vmatmul.f32.gmra.mxu0 %v189
  %v274 = vpop.f32.mrf.mxu0
  %v275 = vadd.f32 %v234, %v274
  %276 = vmatmul.f32.gmra.mxu0 %v190
  %v277 = vpop.f32.mrf.mxu0
  %v278 = vadd.f32 %v234, %v277
  %279 = vmatmul.f32.gmra.mxu0 %v191
  %v280 = vpop.f32.mrf.mxu0
  %v281 = vadd.f32 %v234, %v280
  %282 = vmatmul.f32.gmra.mxu0 %v192
  %v283 = vpop.f32.mrf.mxu0
  %v284 = vadd.f32 %v234, %v283
  %285 = vmatmul.f32.gmra.mxu0 %v193
  %v286 = vpop.f32.mrf.mxu0
  %v287 = vadd.f32 %v234, %v286
  %288 = vmatmul.f32.gmra.mxu0 %v194
  %v289 = vpop.f32.mrf.mxu0
  %v290 = vadd.f32 %v234, %v289
  %291 = vmatmul.f32.gmra.mxu0 %v195
  %v292 = vpop.f32.mrf.mxu0
  %v293 = vadd.f32 %v234, %v292
  %294 = vmatmul.f32.gmra.mxu0 %v196
  %v295 = vpop.f32.mrf.mxu0
  %v296 = vadd.f32 %v234, %v295
  %297 = vmatmul.f32.gmra.mxu0 %v197
  %v298 = vpop.f32.mrf.mxu0
  %v299 = vadd.f32 %v234, %v298
  %300 = vmatmul.f32.gmra.mxu0 %v198
  %v301 = vpop.f32.mrf.mxu0
  %v302 = vadd.f32 %v234, %v301
  %303 = vmatmul.f32.gmra.mxu0 %v199
  %v304 = vpop.f32.mrf.mxu0
  %v305 = vadd.f32 %v234, %v304
  %306 = vmatmul.f32.gmra.mxu0 %v200
  %v307 = vpop.f32.mrf.mxu0
  %v308 = vadd.f32 %v234, %v307
  %309 = vmatmul.f32.gmra.mxu0 %v201
  %v310 = vpop.f32.mrf.mxu0
  %v311 = vadd.f32 %v234, %v310
  %312 = vmatmul.f32.gmra.mxu0 %v202
  %v313 = vpop.f32.mrf.mxu0
  %v314 = vadd.f32 %v234, %v313
  %315 = vmatmul.f32.gmra.mxu0 %v203
  %v316 = vpop.f32.mrf.mxu0
  %v317 = vadd.f32 %v234, %v316
  %318 = vmatmul.f32.gmra.mxu0 %v204
  %v319 = vpop.f32.mrf.mxu0
  %v320 = vadd.f32 %v234, %v319
  %321 = vmatmul.f32.gmra.mxu0 %v205
  %v322 = vpop.f32.mrf.mxu0
  %v323 = vadd.f32 %v234, %v322
  %324 = vmatmul.f32.gmra.mxu0 %v206
  %v325 = vpop.f32.mrf.mxu0
  %v326 = vadd.f32 %v234, %v325
  %327 = vmatmul.f32.gmra.mxu0 %v207
  %v328 = vpop.f32.mrf.mxu0
  %v329 = vadd.f32 %v234, %v328
  %330 = vmatmul.f32.gmra.mxu0 %v208
  %v331 = vpop.f32.mrf.mxu0
  %v332 = vadd.f32 %v234, %v331
  %333 = vmatmul.f32.gmra.mxu0 %v209
  %v334 = vpop.f32.mrf.mxu0
  %v335 = vadd.f32 %v234, %v334
  %336 = vmatmul.f32.gmra.mxu0 %v210
  %v337 = vpop.f32.mrf.mxu0
  %v338 = vadd.f32 %v234, %v337
  %339 = vmatmul.f32.gmra.mxu0 %v211
  %v340 = vpop.f32.mrf.mxu0
  %v341 = vadd.f32 %v234, %v340
  %342 = vmatmul.f32.gmra.mxu0 %v212
  %v343 = vpop.f32.mrf.mxu0
  %v344 = vadd.f32 %v234, %v343
  %345 = vmatmul.f32.gmra.mxu0 %v213
  %v346 = vpop.f32.mrf.mxu0
  %v347 = vadd.f32 %v234, %v346
  %348 = vdwg.mxu0
  %v349 = vmax.f32 %v254, 0.0
  %v350 = vmax.f32 %v257, 0.0
  %v351 = vmax.f32 %v260, 0.0
  %v352 = vmax.f32 %v263, 0.0
  %v353 = vmax.f32 %v266, 0.0
  %v354 = vmax.f32 %v269, 0.0
  %v355 = vmax.f32 %v272, 0.0
  %v356 = vmax.f32 %v275, 0.0
  %v357 = vmax.f32 %v278, 0.0
  %v358 = vmax.f32 %v281, 0.0
  %v359 = vmax.f32 %v284, 0.0
  %v360 = vmax.f32 %v287, 0.0
  %v361 = vmax.f32 %v290, 0.0
  %v362 = vmax.f32 %v293, 0.0
  %v363 = vmax.f32 %v296, 0.0
  %v364 = vmax.f32 %v299, 0.0
  %v365 = vmax.f32 %v302, 0.0
  %v366 = vmax.f32 %v305, 0.0
  %v367 = vmax.f32 %v308, 0.0
  %v368 = vmax.f32 %v311, 0.0
  %v369 = vmax.f32 %v314, 0.0
  %v370 = vmax.f32 %v317, 0.0
  %v371 = vmax.f32 %v320, 0.0
  %v372 = vmax.f32 %v323, 0.0
  %v373 = vmax.f32 %v326, 0.0
  %v374 = vmax.f32 %v329, 0.0
  %v375 = vmax.f32 %v332, 0.0
  %v376 = vmax.f32 %v335, 0.0
  %v377 = vmax.f32 %v338, 0.0
  %v378 = vmax.f32 %v341, 0.0
  %v379 = vmax.f32 %v344, 0.0
  %v380 = vmax.f32 %v347, 0.0
  %s381 = scalar_lea.vmem %s1, 256
  %v382 = vld [vmem:[%s381] sm:$0xff]
  %v383 = vld [vmem:[%s381 + $0x8] sm:$0xff]
  %v384 = vld [vmem:[%s381 + $0x10] sm:$0xff]
  %v385 = vld [vmem:[%s381 + $0x18] sm:$0xff]
  %v386 = vld [vmem:[%s381 + $0x20] sm:$0xff]
  %v387 = vld [vmem:[%s381 + $0x28] sm:$0xff]
  %v388 = vld [vmem:[%s381 + $0x30] sm:$0xff]
  %v389 = vld [vmem:[%s381 + $0x38] sm:$0xff]
  %v390 = vld [vmem:[%s381 + $0x40] sm:$0xff]
  %v391 = vld [vmem:[%s381 + $0x48] sm:$0xff]
  %v392 = vld [vmem:[%s381 + $0x50] sm:$0xff]
  %v393 = vld [vmem:[%s381 + $0x58] sm:$0xff]
  %v394 = vld [vmem:[%s381 + $0x60] sm:$0xff]
  %v395 = vld [vmem:[%s381 + $0x68] sm:$0xff]
  %v396 = vld [vmem:[%s381 + $0x70] sm:$0xff]
  %v397 = vld [vmem:[%s381 + $0x78] sm:$0xff]
  %s398 = scalar_lea.vmem %s2, 2
  %v399 = vld [vmem:[%s398] sm:$0x1]
  %v401 = vperm.slane %v399, 0
  %403 = vmatpush.msra.mxu0 %v397
  %404 = vmatpush.msra.mxu0 %v396
  %405 = vmatpush.msra.mxu0 %v395
  %406 = vmatpush.msra.mxu0 %v394
  %407 = vmatpush.msra.mxu0 %v393
  %408 = vmatpush.msra.mxu0 %v392
  %409 = vmatpush.msra.mxu0 %v391
  %410 = vmatpush.msra.mxu0 %v390
  %411 = vmatpush.msra.mxu0 %v389
  %412 = vmatpush.msra.mxu0 %v388
  %413 = vmatpush.msra.mxu0 %v387
  %414 = vmatpush.msra.mxu0 %v386
  %415 = vmatpush.msra.mxu0 %v385
  %416 = vmatpush.msra.mxu0 %v384
  %417 = vmatpush.msra.mxu0 %v383
  %418 = vmatpush.msra.mxu0 %v382
  %419 = vmatmul.f32.gmra.mxu0 %v349
  %v420 = vpop.f32.mrf.mxu0
  %v421 = vadd.f32 %v401, %v420
  %422 = vmatmul.f32.gmra.mxu0 %v350
  %v423 = vpop.f32.mrf.mxu0
  %v424 = vadd.f32 %v401, %v423
  %425 = vmatmul.f32.gmra.mxu0 %v351
  %v426 = vpop.f32.mrf.mxu0
  %v427 = vadd.f32 %v401, %v426
  %428 = vmatmul.f32.gmra.mxu0 %v352
  %v429 = vpop.f32.mrf.mxu0
  %v430 = vadd.f32 %v401, %v429
  %431 = vmatmul.f32.gmra.mxu0 %v353
  %v432 = vpop.f32.mrf.mxu0
  %v433 = vadd.f32 %v401, %v432
  %434 = vmatmul.f32.gmra.mxu0 %v354
  %v435 = vpop.f32.mrf.mxu0
  %v436 = vadd.f32 %v401, %v435
  %437 = vmatmul.f32.gmra.mxu0 %v355
  %v438 = vpop.f32.mrf.mxu0
  %v439 = vadd.f32 %v401, %v438
  %440 = vmatmul.f32.gmra.mxu0 %v356
  %v441 = vpop.f32.mrf.mxu0
  %v442 = vadd.f32 %v401, %v441
  %443 = vmatmul.f32.gmra.mxu0 %v357
  %v444 = vpop.f32.mrf.mxu0
  %v445 = vadd.f32 %v401, %v444
  %446 = vmatmul.f32.gmra.mxu0 %v358
  %v447 = vpop.f32.mrf.mxu0
  %v448 = vadd.f32 %v401, %v447
  %449 = vmatmul.f32.gmra.mxu0 %v359
  %v450 = vpop.f32.mrf.mxu0
  %v451 = vadd.f32 %v401, %v450
  %452 = vmatmul.f32.gmra.mxu0 %v360
  %v453 = vpop.f32.mrf.mxu0
  %v454 = vadd.f32 %v401, %v453
  %455 = vmatmul.f32.gmra.mxu0 %v361
  %v456 = vpop.f32.mrf.mxu0
  %v457 = vadd.f32 %v401, %v456
  %458 = vmatmul.f32.gmra.mxu0 %v362
  %v459 = vpop.f32.mrf.mxu0
  %v460 = vadd.f32 %v401, %v459
  %461 = vmatmul.f32.gmra.mxu0 %v363
  %v462 = vpop.f32.mrf.mxu0
  %v463 = vadd.f32 %v401, %v462
  %464 = vmatmul.f32.gmra.mxu0 %v364
  %v465 = vpop.f32.mrf.mxu0
  %v466 = vadd.f32 %v401, %v465
  %467 = vmatmul.f32.gmra.mxu0 %v365
  %v468 = vpop.f32.mrf.mxu0
  %v469 = vadd.f32 %v401, %v468
  %470 = vmatmul.f32.gmra.mxu0 %v366
  %v471 = vpop.f32.mrf.mxu0
  %v472 = vadd.f32 %v401, %v471
  %473 = vmatmul.f32.gmra.mxu0 %v367
  %v474 = vpop.f32.mrf.mxu0
  %v475 = vadd.f32 %v401, %v474
  %476 = vmatmul.f32.gmra.mxu0 %v368
  %v477 = vpop.f32.mrf.mxu0
  %v478 = vadd.f32 %v401, %v477
  %479 = vmatmul.f32.gmra.mxu0 %v369
  %v480 = vpop.f32.mrf.mxu0
  %v481 = vadd.f32 %v401, %v480
  %482 = vmatmul.f32.gmra.mxu0 %v370
  %v483 = vpop.f32.mrf.mxu0
  %v484 = vadd.f32 %v401, %v483
  %485 = vmatmul.f32.gmra.mxu0 %v371
  %v486 = vpop.f32.mrf.mxu0
  %v487 = vadd.f32 %v401, %v486
  %488 = vmatmul.f32.gmra.mxu0 %v372
  %v489 = vpop.f32.mrf.mxu0
  %v490 = vadd.f32 %v401, %v489
  %491 = vmatmul.f32.gmra.mxu0 %v373
  %v492 = vpop.f32.mrf.mxu0
  %v493 = vadd.f32 %v401, %v492
  %494 = vmatmul.f32.gmra.mxu0 %v374
  %v495 = vpop.f32.mrf.mxu0
  %v496 = vadd.f32 %v401, %v495
  %497 = vmatmul.f32.gmra.mxu0 %v375
  %v498 = vpop.f32.mrf.mxu0
  %v499 = vadd.f32 %v401, %v498
  %500 = vmatmul.f32.gmra.mxu0 %v376
  %v501 = vpop.f32.mrf.mxu0
  %v502 = vadd.f32 %v401, %v501
  %503 = vmatmul.f32.gmra.mxu0 %v377
  %v504 = vpop.f32.mrf.mxu0
  %v505 = vadd.f32 %v401, %v504
  %506 = vmatmul.f32.gmra.mxu0 %v378
  %v507 = vpop.f32.mrf.mxu0
  %v508 = vadd.f32 %v401, %v507
  %509 = vmatmul.f32.gmra.mxu0 %v379
  %v510 = vpop.f32.mrf.mxu0
  %v511 = vadd.f32 %v401, %v510
  %512 = vmatmul.f32.gmra.mxu0 %v380
  %v513 = vpop.f32.mrf.mxu0
  %v514 = vadd.f32 %v401, %v513
  %515 = vdwg.mxu0
  %v516 = vmax.f32 %v421, 0.0
  %v517 = vmax.f32 %v424, 0.0
  %v518 = vmax.f32 %v427, 0.0
  %v519 = vmax.f32 %v430, 0.0
  %v520 = vmax.f32 %v433, 0.0
  %v521 = vmax.f32 %v436, 0.0
  %v522 = vmax.f32 %v439, 0.0
  %v523 = vmax.f32 %v442, 0.0
  %v524 = vmax.f32 %v445, 0.0
  %v525 = vmax.f32 %v448, 0.0
  %v526 = vmax.f32 %v451, 0.0
  %v527 = vmax.f32 %v454, 0.0
  %v528 = vmax.f32 %v457, 0.0
  %v529 = vmax.f32 %v460, 0.0
  %v530 = vmax.f32 %v463, 0.0
  %v531 = vmax.f32 %v466, 0.0
  %v532 = vmax.f32 %v469, 0.0
  %v533 = vmax.f32 %v472, 0.0
  %v534 = vmax.f32 %v475, 0.0
  %v535 = vmax.f32 %v478, 0.0
  %v536 = vmax.f32 %v481, 0.0
  %v537 = vmax.f32 %v484, 0.0
  %v538 = vmax.f32 %v487, 0.0
  %v539 = vmax.f32 %v490, 0.0
  %v540 = vmax.f32 %v493, 0.0
  %v541 = vmax.f32 %v496, 0.0
  %v542 = vmax.f32 %v499, 0.0
  %v543 = vmax.f32 %v502, 0.0
  %v544 = vmax.f32 %v505, 0.0
  %v545 = vmax.f32 %v508, 0.0
  %v546 = vmax.f32 %v511, 0.0
  %v547 = vmax.f32 %v514, 0.0
  %s548 = scalar_lea.vmem %s1, 384
  %v549 = vld [vmem:[%s548] sm:$0xff]
  %v550 = vld [vmem:[%s548 + $0x8] sm:$0xff]
  %v551 = vld [vmem:[%s548 + $0x10] sm:$0xff]
  %v552 = vld [vmem:[%s548 + $0x18] sm:$0xff]
  %v553 = vld [vmem:[%s548 + $0x20] sm:$0xff]
  %v554 = vld [vmem:[%s548 + $0x28] sm:$0xff]
  %v555 = vld [vmem:[%s548 + $0x30] sm:$0xff]
  %v556 = vld [vmem:[%s548 + $0x38] sm:$0xff]
  %v557 = vld [vmem:[%s548 + $0x40] sm:$0xff]
  %v558 = vld [vmem:[%s548 + $0x48] sm:$0xff]
  %v559 = vld [vmem:[%s548 + $0x50] sm:$0xff]
  %v560 = vld [vmem:[%s548 + $0x58] sm:$0xff]
  %v561 = vld [vmem:[%s548 + $0x60] sm:$0xff]
  %v562 = vld [vmem:[%s548 + $0x68] sm:$0xff]
  %v563 = vld [vmem:[%s548 + $0x70] sm:$0xff]
  %v564 = vld [vmem:[%s548 + $0x78] sm:$0xff]
  %s565 = scalar_lea.vmem %s2, 3
  %v566 = vld [vmem:[%s565] sm:$0x1]
  %v568 = vperm.slane %v566, 0
  %570 = vmatpush.msra.mxu0 %v564
  %571 = vmatpush.msra.mxu0 %v563
  %572 = vmatpush.msra.mxu0 %v562
  %573 = vmatpush.msra.mxu0 %v561
  %574 = vmatpush.msra.mxu0 %v560
  %575 = vmatpush.msra.mxu0 %v559
  %576 = vmatpush.msra.mxu0 %v558
  %577 = vmatpush.msra.mxu0 %v557
  %578 = vmatpush.msra.mxu0 %v556
  %579 = vmatpush.msra.mxu0 %v555
  %580 = vmatpush.msra.mxu0 %v554
  %581 = vmatpush.msra.mxu0 %v553
  %582 = vmatpush.msra.mxu0 %v552
  %583 = vmatpush.msra.mxu0 %v551
  %584 = vmatpush.msra.mxu0 %v550
  %585 = vmatpush.msra.mxu0 %v549
  %586 = vmatmul.f32.gmra.mxu0 %v516
  %v587 = vpop.f32.mrf.mxu0
  %v588 = vadd.f32 %v568, %v587
  %589 = vmatmul.f32.gmra.mxu0 %v517
  %v590 = vpop.f32.mrf.mxu0
  %v591 = vadd.f32 %v568, %v590
  %592 = vmatmul.f32.gmra.mxu0 %v518
  %v593 = vpop.f32.mrf.mxu0
  %v594 = vadd.f32 %v568, %v593
  %595 = vmatmul.f32.gmra.mxu0 %v519
  %v596 = vpop.f32.mrf.mxu0
  %v597 = vadd.f32 %v568, %v596
  %598 = vmatmul.f32.gmra.mxu0 %v520
  %v599 = vpop.f32.mrf.mxu0
  %v600 = vadd.f32 %v568, %v599
  %601 = vmatmul.f32.gmra.mxu0 %v521
  %v602 = vpop.f32.mrf.mxu0
  %v603 = vadd.f32 %v568, %v602
  %604 = vmatmul.f32.gmra.mxu0 %v522
  %v605 = vpop.f32.mrf.mxu0
  %v606 = vadd.f32 %v568, %v605
  %607 = vmatmul.f32.gmra.mxu0 %v523
  %v608 = vpop.f32.mrf.mxu0
  %v609 = vadd.f32 %v568, %v608
  %610 = vmatmul.f32.gmra.mxu0 %v524
  %v611 = vpop.f32.mrf.mxu0
  %v612 = vadd.f32 %v568, %v611
  %613 = vmatmul.f32.gmra.mxu0 %v525
  %v614 = vpop.f32.mrf.mxu0
  %v615 = vadd.f32 %v568, %v614
  %616 = vmatmul.f32.gmra.mxu0 %v526
  %v617 = vpop.f32.mrf.mxu0
  %v618 = vadd.f32 %v568, %v617
  %619 = vmatmul.f32.gmra.mxu0 %v527
  %v620 = vpop.f32.mrf.mxu0
  %v621 = vadd.f32 %v568, %v620
  %622 = vmatmul.f32.gmra.mxu0 %v528
  %v623 = vpop.f32.mrf.mxu0
  %v624 = vadd.f32 %v568, %v623
  %625 = vmatmul.f32.gmra.mxu0 %v529
  %v626 = vpop.f32.mrf.mxu0
  %v627 = vadd.f32 %v568, %v626
  %628 = vmatmul.f32.gmra.mxu0 %v530
  %v629 = vpop.f32.mrf.mxu0
  %v630 = vadd.f32 %v568, %v629
  %631 = vmatmul.f32.gmra.mxu0 %v531
  %v632 = vpop.f32.mrf.mxu0
  %v633 = vadd.f32 %v568, %v632
  %634 = vmatmul.f32.gmra.mxu0 %v532
  %v635 = vpop.f32.mrf.mxu0
  %v636 = vadd.f32 %v568, %v635
  %637 = vmatmul.f32.gmra.mxu0 %v533
  %v638 = vpop.f32.mrf.mxu0
  %v639 = vadd.f32 %v568, %v638
  %640 = vmatmul.f32.gmra.mxu0 %v534
  %v641 = vpop.f32.mrf.mxu0
  %v642 = vadd.f32 %v568, %v641
  %643 = vmatmul.f32.gmra.mxu0 %v535
  %v644 = vpop.f32.mrf.mxu0
  %v645 = vadd.f32 %v568, %v644
  %646 = vmatmul.f32.gmra.mxu0 %v536
  %v647 = vpop.f32.mrf.mxu0
  %v648 = vadd.f32 %v568, %v647
  %649 = vmatmul.f32.gmra.mxu0 %v537
  %v650 = vpop.f32.mrf.mxu0
  %v651 = vadd.f32 %v568, %v650
  %652 = vmatmul.f32.gmra.mxu0 %v538
  %v653 = vpop.f32.mrf.mxu0
  %v654 = vadd.f32 %v568, %v653
  %655 = vmatmul.f32.gmra.mxu0 %v539
  %v656 = vpop.f32.mrf.mxu0
  %v657 = vadd.f32 %v568, %v656
  %658 = vmatmul.f32.gmra.mxu0 %v540
  %v659 = vpop.f32.mrf.mxu0
  %v660 = vadd.f32 %v568, %v659
  %661 = vmatmul.f32.gmra.mxu0 %v541
  %v662 = vpop.f32.mrf.mxu0
  %v663 = vadd.f32 %v568, %v662
  %664 = vmatmul.f32.gmra.mxu0 %v542
  %v665 = vpop.f32.mrf.mxu0
  %v666 = vadd.f32 %v568, %v665
  %667 = vmatmul.f32.gmra.mxu0 %v543
  %v668 = vpop.f32.mrf.mxu0
  %v669 = vadd.f32 %v568, %v668
  %670 = vmatmul.f32.gmra.mxu0 %v544
  %v671 = vpop.f32.mrf.mxu0
  %v672 = vadd.f32 %v568, %v671
  %673 = vmatmul.f32.gmra.mxu0 %v545
  %v674 = vpop.f32.mrf.mxu0
  %v675 = vadd.f32 %v568, %v674
  %676 = vmatmul.f32.gmra.mxu0 %v546
  %v677 = vpop.f32.mrf.mxu0
  %v678 = vadd.f32 %v568, %v677
  %679 = vmatmul.f32.gmra.mxu0 %v547
  %v680 = vpop.f32.mrf.mxu0
  %v681 = vadd.f32 %v568, %v680
  %682 = vdwg.mxu0
  %v683 = vmax.f32 %v588, 0.0
  %v684 = vmax.f32 %v591, 0.0
  %v685 = vmax.f32 %v594, 0.0
  %v686 = vmax.f32 %v597, 0.0
  %v687 = vmax.f32 %v600, 0.0
  %v688 = vmax.f32 %v603, 0.0
  %v689 = vmax.f32 %v606, 0.0
  %v690 = vmax.f32 %v609, 0.0
  %v691 = vmax.f32 %v612, 0.0
  %v692 = vmax.f32 %v615, 0.0
  %v693 = vmax.f32 %v618, 0.0
  %v694 = vmax.f32 %v621, 0.0
  %v695 = vmax.f32 %v624, 0.0
  %v696 = vmax.f32 %v627, 0.0
  %v697 = vmax.f32 %v630, 0.0
  %v698 = vmax.f32 %v633, 0.0
  %v699 = vmax.f32 %v636, 0.0
  %v700 = vmax.f32 %v639, 0.0
  %v701 = vmax.f32 %v642, 0.0
  %v702 = vmax.f32 %v645, 0.0
  %v703 = vmax.f32 %v648, 0.0
  %v704 = vmax.f32 %v651, 0.0
  %v705 = vmax.f32 %v654, 0.0
  %v706 = vmax.f32 %v657, 0.0
  %v707 = vmax.f32 %v660, 0.0
  %v708 = vmax.f32 %v663, 0.0
  %v709 = vmax.f32 %v666, 0.0
  %v710 = vmax.f32 %v669, 0.0
  %v711 = vmax.f32 %v672, 0.0
  %v712 = vmax.f32 %v675, 0.0
  %v713 = vmax.f32 %v678, 0.0
  %v714 = vmax.f32 %v681, 0.0
  %v715 = vadd.f32 %v683, %v684
  %v716 = vadd.f32 %v715, %v685
  %v717 = vadd.f32 %v716, %v686
  %v718 = vadd.f32 %v717, %v687
  %v719 = vadd.f32 %v718, %v688
  %v720 = vadd.f32 %v719, %v689
  %v721 = vadd.f32 %v720, %v690
  %v722 = vadd.f32 %v721, %v691
  %v723 = vadd.f32 %v722, %v692
  %v724 = vadd.f32 %v723, %v693
  %v725 = vadd.f32 %v724, %v694
  %v726 = vadd.f32 %v725, %v695
  %v727 = vadd.f32 %v726, %v696
  %v728 = vadd.f32 %v727, %v697
  %v729 = vadd.f32 %v728, %v698
  %v730 = vrot.slane %v729, 4
  %v731 = vadd.f32 %v729, %v730
  %v732 = vrot.slane %v731, 2
  %v733 = vadd.f32 %v731, %v732
  %v734 = vrot.slane %v733, 1
  %v735 = vadd.f32 %v733, %v734
  %v736 = vadd.f32 %v699, %v700
  %v737 = vadd.f32 %v736, %v701
  %v738 = vadd.f32 %v737, %v702
  %v739 = vadd.f32 %v738, %v703
  %v740 = vadd.f32 %v739, %v704
  %v741 = vadd.f32 %v740, %v705
  %v742 = vadd.f32 %v741, %v706
  %v743 = vadd.f32 %v742, %v707
  %v744 = vadd.f32 %v743, %v708
  %v745 = vadd.f32 %v744, %v709
  %v746 = vadd.f32 %v745, %v710
  %v747 = vadd.f32 %v746, %v711
  %v748 = vadd.f32 %v747, %v712
  %v749 = vadd.f32 %v748, %v713
  %v750 = vadd.f32 %v749, %v714
  %v751 = vrot.slane %v750, 4
  %v752 = vadd.f32 %v750, %v751
  %v753 = vrot.slane %v752, 2
  %v754 = vadd.f32 %v752, %v753
  %v755 = vrot.slane %v754, 1
  %v756 = vadd.f32 %v754, %v755
  %v757 = vrcp.pop 128.0
  %v758 = vmul.f32 128.0, %v757
  %v759 = vsub.f32 1.0, %v758
  %v760 = vmul.f32 %v757, %v759
  %v761 = vadd.f32 %v757, %v760
  %vm762 = vweird.f32 %v757
  %v763 = vsel %vm762, %v757, %v761
  %v764 = vmul.f32 %v735, %v763
  %v765 = vmul.f32 %v756, %v763
  %v766 = vld [vmem:[%s3] sm:$0x1]
  %v768 = vperm.slane %v766, 0
  %v770 = vmul.f32 %v764, %v768
  %v771 = vmul.f32 %v765, %v768
  %v774 = vrot.slane %v771, 7
  %vm775 = vcmask 1041409
  %v776 = vsel %vm775, %v774, %v770
  %vm778 = vcmask 1041408
  %v779 = vsel %vm778, %v776, 0.0
  %780 = vadd.xlane.f32.xlu0 %v779
  %v781 = vpop.xlane.xlu0 %780
  %vm782 = vcmask 1024
  %783 = vst.msk [vmem:[%s4] sm:$0x3] %vm782, %v781
  // Predicated region
  $region18: #{point_forward_and_loss.1} parent=0 // pred_check
    _
  $region19: #{point_forward_and_loss.1} parent=0 // pred_check_branch
    %785 = sbr.rel (0) target = $region21
  $region20: #{point_forward_and_loss.1} parent=0 // pred_region
    _
  $region21: #{point_forward_and_loss.1} parent=0 // pred_fallthru
    _
  // Predicated region
  $region22: #{point_forward_and_loss.1} parent=0 // pred_check
    _
  $region23: #{point_forward_and_loss.1} parent=0 // pred_check_branch
    %787 = sbr.rel (0) target = $region25
  $region24: #{point_forward_and_loss.1} parent=0 // pred_region
    _
  $region25: #{point_forward_and_loss.1} parent=0 // pred_fallthru
    _

</llo_original>
